<compile_context>
chip_gen: v5e
topology: v5e:2x2
jax: 0.10.0
libtpu: 0.0.40
codegen_flags: <defaults>
</compile_context>

<pallas_src>
import math
from functools import partial

import jax
import jax.numpy as jnp
from jax import lax
from jax.experimental import pallas as pl
from jax.experimental.pallas import tpu as pltpu


def _round_up(x, m):
    return ((x + m - 1) // m) * m


def _choose_tile(dim, preferred, align):
    """Pick (tile, padded_dim): tile % align == 0, padded_dim % tile == 0.

    When `dim` is already align-divisible we pick the largest divisor of dim
    (multiple of align, <= preferred) so no host-side jnp.pad copy is needed.
    """
    if dim % align == 0:
        best = align
        cap = min(preferred, dim)
        t = align
        while t <= cap:
            if dim % t == 0:
                best = t
            t += align
        return best, dim
    padded = _round_up(dim, align)
    tile = min(_round_up(preferred, align), padded)
    padded = _round_up(padded, tile)
    return tile, padded


def _pad2(a, rows, cols):
    pr, pc = rows - a.shape[0], cols - a.shape[1]
    if pr == 0 and pc == 0:
        return a
    return jnp.pad(a, ((0, pr), (0, pc)))


def _pad_row(v, n):
    p = n - v.shape[0]
    if p:
        v = jnp.pad(v, (0, p))
    return v.reshape(1, n)


# ---------------------------------------------------------------------------
# Kernels
# ---------------------------------------------------------------------------
_DN = (((1,), (1,)), ((), ()))  # contract last dim of x with last dim of w (no transpose)


def _noisy_linear_kernel(x_ref, wmu_ref, wsig_ref, eps_in_ref, eps_out_ref,
                         bias_ref, o_ref, acc_mu_ref, acc_sig_ref,
                         *, matmul_dtype):
    k = pl.program_id(2)

    @pl.when(k == 0)
    def _():
        acc_mu_ref[...] = jnp.zeros_like(acc_mu_ref)
        acc_sig_ref[...] = jnp.zeros_like(acc_sig_ref)

    x = x_ref[...]                                   # [tm, tk] f32
    x_eps = x * eps_in_ref[...]                      # [tm, tk] * [1, tk]  (VPU, cheap)
    wmu = wmu_ref[...]                               # [tn, tk] (possibly bf16 storage)
    wsig = wsig_ref[...]
    if matmul_dtype is not None:
        x = x.astype(matmul_dtype)
        x_eps = x_eps.astype(matmul_dtype)
        wmu = wmu.astype(matmul_dtype)               # no-op if stored in matmul_dtype
        wsig = wsig.astype(matmul_dtype)

    # Two MXU matmuls per step; no per-weight-element noise combine.
    acc_mu_ref[...] += lax.dot_general(
        x, wmu, dimension_numbers=_DN, preferred_element_type=jnp.float32)
    acc_sig_ref[...] += lax.dot_general(
        x_eps, wsig, dimension_numbers=_DN, preferred_element_type=jnp.float32)

    @pl.when(k == pl.num_programs(2) - 1)
    def _():
        # eps_out / bias are lane-dense [1, tn] rows; one VPU pass at finalize.
        o_ref[...] = (acc_mu_ref[...]
                      + eps_out_ref[...] * acc_sig_ref[...]
                      + bias_ref[...]).astype(o_ref.dtype)


def _mu_linear_kernel(x_ref, wmu_ref, bias_ref, o_ref, acc_ref, *, matmul_dtype):
    # Eval-mode path: weight = weight_mu, bias = bias_mu only.
    k = pl.program_id(2)

    @pl.when(k == 0)
    def _():
        acc_ref[...] = jnp.zeros_like(acc_ref)

    x = x_ref[...]
    w = wmu_ref[...]
    if matmul_dtype is not None:
        x = x.astype(matmul_dtype)
        w = w.astype(matmul_dtype)

    acc_ref[...] += lax.dot_general(
        x, w, dimension_numbers=_DN, preferred_element_type=jnp.float32)

    @pl.when(k == pl.num_programs(2) - 1)
    def _():
        o_ref[...] = (acc_ref[...] + bias_ref[...]).astype(o_ref.dtype)


# ---------------------------------------------------------------------------
# Wrapper
# ---------------------------------------------------------------------------
def noisy_linear(x, weight_mu, weight_sigma, eps_in, eps_out,
                 bias_mu, bias_sigma, bias_epsilon, *,
                 training=True, matmul_dtype=jnp.bfloat16):
    """Pallas-backed NoisyLinear forward.

    x:                    [B, in]   f32
    weight_mu/sigma:      [out, in] f32 (PyTorch F.linear convention)
    eps_in [in], eps_out [out]: factorized noise vectors
                          (weight_epsilon = outer(eps_out, eps_in), never materialized)
    bias_*: [out]
    matmul_dtype: dtype fed to the MXU / used for weight storage inside the
                  kernel (default bf16; pass None for an exact f32 path).
    """
    B, K = x.shape
    N, K2 = weight_mu.shape
    assert K == K2

    # ---- tile sizes: large (amortize per-step overhead, bigger DMA bursts),
    # chosen to divide the true dims when possible so the weight matrices are
    # never copied by jnp.pad.  Footprint stays well under 32 MiB scoped VMEM.
    tk_pref = 2048 if matmul_dtype is not None else 1024
    tm, Bp = _choose_tile(B, 256, 8)
    tn, Np = _choose_tile(N, 512, 128)
    tk, Kp = _choose_tile(K, tk_pref, 128)
    grid = (Bp // tm, Np // tn, Kp // tk)

    w_store_dtype = matmul_dtype if matmul_dtype is not None else weight_mu.dtype

    xp = _pad2(x, Bp, Kp)
    wmu = _pad2(weight_mu.astype(w_store_dtype), Np, Kp)

    x_spec = pl.BlockSpec((tm, tk), lambda i, j, k: (i, k))
    # TODO(synk): if profiling shows exposed weight DMA, add
    #             pipeline_mode=pl.Buffered(3) to the weight specs.
    w_spec = pl.BlockSpec((tn, tk), lambda i, j, k: (j, k))
    nrow_spec = pl.BlockSpec((1, tn), lambda i, j, k: (0, j))   # eps_out / bias rows
    krow_spec = pl.BlockSpec((1, tk), lambda i, j, k: (0, k))   # eps_in row
    out_spec = pl.BlockSpec((tm, tn), lambda i, j, k: (i, j))

    w_bytes = jnp.dtype(w_store_dtype).itemsize
    n_w = 2 if training else 1
    cost = pl.CostEstimate(
        flops=(4 if training else 2) * B * K * N,
        transcendentals=0,
        # weight streams are re-fetched once per i-tile; x once per j-tile.
        bytes_accessed=int(n_w * Np * Kp * w_bytes * grid[0]
                           + Bp * Kp * 4 * grid[1]
                           + Bp * Np * 4),
    )
    cparams = pltpu.CompilerParams(
        dimension_semantics=("parallel", "parallel", "arbitrary"))

    if training:
        wsig = _pad2(weight_sigma.astype(w_store_dtype), Np, Kp)
        e_in = _pad_row(eps_in.astype(jnp.float32), Kp)
        e_out = _pad_row(eps_out.astype(jnp.float32), Np)
        # Fold the bias on the host (length-N op) -> one [1, Np] stream.
        bias = _pad_row((bias_mu + bias_sigma * bias_epsilon).astype(jnp.float32), Np)

        out = pl.pallas_call(
            partial(_noisy_linear_kernel, matmul_dtype=matmul_dtype),
            out_shape=jax.ShapeDtypeStruct((Bp, Np), x.dtype),
            grid_spec=pltpu.PrefetchScalarGridSpec(
                num_scalar_prefetch=0,
                grid=grid,
                in_specs=[x_spec,            # x
                          w_spec, w_spec,    # weight_mu, weight_sigma
                          krow_spec,         # eps_in  [1, tk]
                          nrow_spec,         # eps_out [1, tn]
                          nrow_spec],        # folded bias [1, tn]
                out_specs=out_spec,
                scratch_shapes=[pltpu.VMEM((tm, tn), jnp.float32),
                                pltpu.VMEM((tm, tn), jnp.float32)]),
            compiler_params=cparams,
            cost_estimate=cost,
        )(xp, wmu, wsig, e_in, e_out, bias)
    else:
        bias = _pad_row(bias_mu.astype(jnp.float32), Np)
        out = pl.pallas_call(
            partial(_mu_linear_kernel, matmul_dtype=matmul_dtype),
            out_shape=jax.ShapeDtypeStruct((Bp, Np), x.dtype),
            grid_spec=pltpu.PrefetchScalarGridSpec(
                num_scalar_prefetch=0,
                grid=grid,
                in_specs=[x_spec, w_spec, nrow_spec],
                out_specs=out_spec,
                scratch_shapes=[pltpu.VMEM((tm, tn), jnp.float32)]),
            compiler_params=cparams,
            cost_estimate=cost,
        )(xp, wmu, bias)

    if (Bp, Np) != (B, N):
        out = out[:B, :N]
    return out


# ---------------------------------------------------------------------------
# Deterministic parameter / noise initialization (mirrors the PyTorch module)
# ---------------------------------------------------------------------------
def _scale_noise(key, size):
    x = jax.random.normal(key, (size,), dtype=jnp.float32)
    return jnp.sign(x) * jnp.sqrt(jnp.abs(x))


def init_noisy_linear(key, in_features, out_features, std_init=0.5):
    k_wmu, k_bmu, k_ein, k_eout = jax.random.split(key, 4)
    mu_range = 1.0 / math.sqrt(in_features)

    weight_mu = jax.random.uniform(
        k_wmu, (out_features, in_features), jnp.float32, -mu_range, mu_range)
    weight_sigma = jnp.full((out_features, in_features),
                            std_init / math.sqrt(in_features), jnp.float32)
    bias_mu = jax.random.uniform(
        k_bmu, (out_features,), jnp.float32, -mu_range, mu_range)
    bias_sigma = jnp.full((out_features,),
                          std_init / math.sqrt(out_features), jnp.float32)

    eps_in = _scale_noise(k_ein, in_features)
    eps_out = _scale_noise(k_eout, out_features)
    bias_epsilon = eps_out        # same as the PyTorch module's buffer

    return dict(weight_mu=weight_mu, weight_sigma=weight_sigma,
                bias_mu=bias_mu, bias_sigma=bias_sigma,
                eps_in=eps_in, eps_out=eps_out, bias_epsilon=bias_epsilon)


# ---------------------------------------------------------------------------
# Main
# ---------------------------------------------------------------------------
if __name__ == "__main__":
    batch, in_features, out_features = 2, 32, 64

    key = jax.random.PRNGKey(0)
    k_params, k_x = jax.random.split(key)
    params = init_noisy_linear(k_params, in_features, out_features, std_init=0.5)
    x = jax.random.normal(k_x, (batch, in_features), dtype=jnp.float32)

    args = (x,
            params["weight_mu"], params["weight_sigma"],
            params["eps_in"], params["eps_out"],
            params["bias_mu"], params["bias_sigma"], params["bias_epsilon"])

    # Default (bf16 MXU / bf16 weight storage) paths.
    out_train_bf16 = jax.block_until_ready(noisy_linear(*args, training=True))
    out_eval_bf16 = jax.block_until_ready(noisy_linear(*args, training=False))
    # Exact f32 paths.
    out_train_f32 = jax.block_until_ready(
        noisy_linear(*args, training=True, matmul_dtype=None))
    out_eval_f32 = jax.block_until_ready(
        noisy_linear(*args, training=False, matmul_dtype=None))

    # Pure-JAX references (PyTorch training / eval semantics).
    w_eps = jnp.outer(params["eps_out"], params["eps_in"])
    w_ref = params["weight_mu"] + params["weight_sigma"] * w_eps
    b_ref = params["bias_mu"] + params["bias_sigma"] * params["bias_epsilon"]
    ref_train = x @ w_ref.T + b_ref
    ref_eval = x @ params["weight_mu"].T + params["bias_mu"]

    assert out_train_bf16.shape == (batch, out_features)
    assert out_eval_bf16.shape == (batch, out_features)
    # f32 path: tight tolerance.
    assert jnp.allclose(out_train_f32, ref_train, atol=1e-5, rtol=1e-5)
    assert jnp.allclose(out_eval_f32, ref_eval, atol=1e-5, rtol=1e-5)
    # bf16 path: looser tolerance (bf16 weight storage / MXU inputs, f32 accum).
    assert jnp.allclose(out_train_bf16, ref_train, atol=1e-1, rtol=5e-2)
    assert jnp.allclose(out_eval_bf16, ref_eval, atol=1e-1, rtol=5e-2)

    print("KERNEL_OK")
</pallas_src>

<mosaic_0001>
module attributes {stable_mosaic.version = 11 : i64} {
  func.func @_noisy_linear_kernel(%arg0: i32, %arg1: i32, %arg2: i32, %arg3: memref<8x128xf32, #tpu.memory_space<vmem>>, %arg4: memref<128x128xbf16, #tpu.memory_space<vmem>>, %arg5: memref<128x128xbf16, #tpu.memory_space<vmem>>, %arg6: memref<1x128xf32, #tpu.memory_space<vmem>>, %arg7: memref<1x128xf32, #tpu.memory_space<vmem>>, %arg8: memref<1x128xf32, #tpu.memory_space<vmem>>, %arg9: memref<8x128xf32, #tpu.memory_space<vmem>>, %arg10: memref<8x128xf32, #tpu.memory_space<vmem>>, %arg11: memref<8x128xf32, #tpu.memory_space<vmem>>) attributes {dimension_semantics = [#tpu.dimension_semantics<parallel>, #tpu.dimension_semantics<parallel>, #tpu.dimension_semantics<arbitrary>], iteration_bounds = array<i64: 1, 1, 1>, scalar_prefetch = 0 : i64, scratch_operands = 2 : i64, tpu.core_type = #tpu.core_type<tc>, window_params = [{transform_indices = @transform_0, window_bounds = array<i64: 8, 128>}, {transform_indices = @transform_1, window_bounds = array<i64: 128, 128>}, {transform_indices = @transform_2, window_bounds = array<i64: 128, 128>}, {transform_indices = @transform_3, window_bounds = array<i64: 1, 128>}, {transform_indices = @transform_4, window_bounds = array<i64: 1, 128>}, {transform_indices = @transform_5, window_bounds = array<i64: 1, 128>}, {transform_indices = @transform_6, window_bounds = array<i64: 8, 128>}]} {
    %c0_i32 = arith.constant 0 : i32
    %0 = arith.cmpi eq, %arg2, %c0_i32 : i32
    %1 = arith.extui %0 : i1 to i32
    %c0_i32_0 = arith.constant 0 : i32
    %2 = arith.cmpi ne, %1, %c0_i32_0 : i32
    scf.if %2 {
      %cst_19 = arith.constant 0.000000e+00 : f32
      %22 = vector.broadcast %cst_19 : f32 to vector<8x128xf32>
      %c0_20 = arith.constant 0 : index
      %c0_21 = arith.constant 0 : index
      %23 = vector.load %arg10[%c0_20, %c0_21] : memref<8x128xf32, #tpu.memory_space<vmem>>, vector<8x128xf32>
      tpu.vector_store %arg10[%c0_20, %c0_21], %22 {strides = array<i32>} : memref<8x128xf32, #tpu.memory_space<vmem>>, vector<8x128xf32>,
      %cst_22 = arith.constant 0.000000e+00 : f32
      %24 = vector.broadcast %cst_22 : f32 to vector<8x128xf32>
      %c0_23 = arith.constant 0 : index
      %c0_24 = arith.constant 0 : index
      %25 = vector.load %arg11[%c0_23, %c0_24] : memref<8x128xf32, #tpu.memory_space<vmem>>, vector<8x128xf32>
      tpu.vector_store %arg11[%c0_23, %c0_24], %24 {strides = array<i32>} : memref<8x128xf32, #tpu.memory_space<vmem>>, vector<8x128xf32>,
    } else {
    }
    %c0 = arith.constant 0 : index
    %c0_1 = arith.constant 0 : index
    %3 = vector.load %arg3[%c0, %c0_1] : memref<8x128xf32, #tpu.memory_space<vmem>>, vector<8x128xf32>
    %c0_2 = arith.constant 0 : index
    %c0_3 = arith.constant 0 : index
    %4 = vector.load %arg6[%c0_2, %c0_3] : memref<1x128xf32, #tpu.memory_space<vmem>>, vector<1x128xf32>
    %5 = vector.broadcast %4 : vector<1x128xf32> to vector<8x128xf32>
    %6 = arith.mulf %3, %5 : vector<8x128xf32>
    %c0_4 = arith.constant 0 : index
    %c0_5 = arith.constant 0 : index
    %7 = vector.load %arg4[%c0_4, %c0_5] : memref<128x128xbf16, #tpu.memory_space<vmem>>, vector<128x128xbf16>
    %c0_6 = arith.constant 0 : index
    %c0_7 = arith.constant 0 : index
    %8 = vector.load %arg5[%c0_6, %c0_7] : memref<128x128xbf16, #tpu.memory_space<vmem>>, vector<128x128xbf16>
    %9 = arith.truncf %3 : vector<8x128xf32> to vector<8x128xbf16>
    %10 = arith.truncf %6 : vector<8x128xf32> to vector<8x128xbf16>
    %c0_8 = arith.constant 0 : index
    %c0_9 = arith.constant 0 : index
    %11 = vector.load %arg10[%c0_8, %c0_9] : memref<8x128xf32, #tpu.memory_space<vmem>>, vector<8x128xf32>
    %cst = arith.constant dense<0.000000e+00> : vector<8x128xf32>
    %12 = tpu.matmul %9, %7, %cst {dimension_numbers = #tpu.dot_dimension_numbers<[1], [1], [0], [0], [0, 0, 1, 0], [], []>} : vector<8x128xbf16>, vector<128x128xbf16>, vector<8x128xf32> -> vector<8x128xf32>
    %13 = arith.addf %11, %12 : vector<8x128xf32>
    %c0_10 = arith.constant 0 : index
    %c0_11 = arith.constant 0 : index
    %14 = vector.load %arg10[%c0_10, %c0_11] : memref<8x128xf32, #tpu.memory_space<vmem>>, vector<8x128xf32>
    tpu.vector_store %arg10[%c0_10, %c0_11], %13 {strides = array<i32>} : memref<8x128xf32, #tpu.memory_space<vmem>>, vector<8x128xf32>,
    %c0_12 = arith.constant 0 : index
    %c0_13 = arith.constant 0 : index
    %15 = vector.load %arg11[%c0_12, %c0_13] : memref<8x128xf32, #tpu.memory_space<vmem>>, vector<8x128xf32>
    %cst_14 = arith.constant dense<0.000000e+00> : vector<8x128xf32>
    %16 = tpu.matmul %10, %8, %cst_14 {dimension_numbers = #tpu.dot_dimension_numbers<[1], [1], [0], [0], [0, 0, 1, 0], [], []>} : vector<8x128xbf16>, vector<128x128xbf16>, vector<8x128xf32> -> vector<8x128xf32>
    %17 = arith.addf %15, %16 : vector<8x128xf32>
    %c0_15 = arith.constant 0 : index
    %c0_16 = arith.constant 0 : index
    %18 = vector.load %arg11[%c0_15, %c0_16] : memref<8x128xf32, #tpu.memory_space<vmem>>, vector<8x128xf32>
    tpu.vector_store %arg11[%c0_15, %c0_16], %17 {strides = array<i32>} : memref<8x128xf32, #tpu.memory_space<vmem>>, vector<8x128xf32>,
    %c0_i32_17 = arith.constant 0 : i32
    %19 = arith.cmpi eq, %arg2, %c0_i32_17 : i32
    %20 = arith.extui %19 : i1 to i32
    %c0_i32_18 = arith.constant 0 : i32
    %21 = arith.cmpi ne, %20, %c0_i32_18 : i32
    scf.if %21 {
      %c0_19 = arith.constant 0 : index
      %c0_20 = arith.constant 0 : index
      %22 = vector.load %arg10[%c0_19, %c0_20] : memref<8x128xf32, #tpu.memory_space<vmem>>, vector<8x128xf32>
      %c0_21 = arith.constant 0 : index
      %c0_22 = arith.constant 0 : index
      %23 = vector.load %arg7[%c0_21, %c0_22] : memref<1x128xf32, #tpu.memory_space<vmem>>, vector<1x128xf32>
      %c0_23 = arith.constant 0 : index
      %c0_24 = arith.constant 0 : index
      %24 = vector.load %arg11[%c0_23, %c0_24] : memref<8x128xf32, #tpu.memory_space<vmem>>, vector<8x128xf32>
      %25 = vector.broadcast %23 : vector<1x128xf32> to vector<8x128xf32>
      %26 = arith.mulf %25, %24 : vector<8x128xf32>
      %27 = arith.addf %22, %26 : vector<8x128xf32>
      %c0_25 = arith.constant 0 : index
      %c0_26 = arith.constant 0 : index
      %28 = vector.load %arg8[%c0_25, %c0_26] : memref<1x128xf32, #tpu.memory_space<vmem>>, vector<1x128xf32>
      %29 = vector.broadcast %28 : vector<1x128xf32> to vector<8x128xf32>
      %30 = arith.addf %27, %29 : vector<8x128xf32>
      %c0_27 = arith.constant 0 : index
      %c0_28 = arith.constant 0 : index
      %31 = vector.load %arg9[%c0_27, %c0_28] : memref<8x128xf32, #tpu.memory_space<vmem>>, vector<8x128xf32>
      tpu.vector_store %arg9[%c0_27, %c0_28], %30 {strides = array<i32>} : memref<8x128xf32, #tpu.memory_space<vmem>>, vector<8x128xf32>,
    } else {
    }
    return
  }
  func.func @transform_0(%arg0: i32, %arg1: i32, %arg2: i32) -> (i32, i32) {
    %c0_i32 = arith.constant 0 : i32
    return %arg0, %arg2 : i32, i32
  }
  func.func @transform_1(%arg0: i32, %arg1: i32, %arg2: i32) -> (i32, i32) {
    %c0_i32 = arith.constant 0 : i32
    return %arg1, %arg2 : i32, i32
  }
  func.func @transform_2(%arg0: i32, %arg1: i32, %arg2: i32) -> (i32, i32) {
    %c0_i32 = arith.constant 0 : i32
    return %arg1, %arg2 : i32, i32
  }
  func.func @transform_3(%arg0: i32, %arg1: i32, %arg2: i32) -> (i32, i32) {
    %c0_i32 = arith.constant 0 : i32
    %c0_i32_0 = arith.constant 0 : i32
    return %c0_i32, %arg2 : i32, i32
  }
  func.func @transform_4(%arg0: i32, %arg1: i32, %arg2: i32) -> (i32, i32) {
    %c0_i32 = arith.constant 0 : i32
    %c0_i32_0 = arith.constant 0 : i32
    return %c0_i32, %arg1 : i32, i32
  }
  func.func @transform_5(%arg0: i32, %arg1: i32, %arg2: i32) -> (i32, i32) {
    %c0_i32 = arith.constant 0 : i32
    %c0_i32_0 = arith.constant 0 : i32
    return %c0_i32, %arg1 : i32, i32
  }
  func.func @transform_6(%arg0: i32, %arg1: i32, %arg2: i32) -> (i32, i32) {
    %c0_i32 = arith.constant 0 : i32
    return %arg0, %arg1 : i32, i32
  }
}

</mosaic_0001>

<llo_original>
// kernel: tpu_custom_call.1
$region0: #{tpu_custom_call.1}
  #allocation0 [shape = 'u32[]', space=smem, size = 0x4, offset = 0x4, fixed_abs, tag = 'smem constant byte address 0x4 - core index']
  #allocation1 [shape = 'u32[72,128]{1,0:T(1,128)}', space=vmem, size = 0x9000, scoped, tag = 'internal scratch']
  #allocation2 [shape = 'f32[8,128]{1,0:T(8,128)}', space=vmem, size = 0x1000, scoped, tag = 'scratch operand']
  #allocation3 [shape = 'f32[8,128]{1,0:T(8,128)}', space=vmem, size = 0x1000, scoped, tag = 'scratch operand']
  %s0 = inlined_call_operand.hbm [shape: f32[8,128], index: 0, kind: input, shape index: {}]
  %s1 = inlined_call_operand.hbm [shape: bf16[128,128], index: 1, kind: input, shape index: {}]
  %s2 = inlined_call_operand.hbm [shape: bf16[128,128], index: 2, kind: input, shape index: {}]
  %s3 = inlined_call_operand.vmem [shape: f32[1,128], index: 3, kind: input, shape index: {}]
  %s4 = inlined_call_operand.vmem [shape: f32[1,128], index: 4, kind: input, shape index: {}]
  %s5 = inlined_call_operand.vmem [shape: f32[1,128], index: 5, kind: input, shape index: {}]
  %s6 = inlined_call_operand.hbm [shape: f32[8,128], index: 6, kind: output, shape index: {}]
  %s7 = sld [smem:[#allocation0]]
  $region54: #{tpu_custom_call.1} parent=0
    _
  %s9 = ssub.s32 1, %s7
  %s10 = scalar_select 0, %s9, %s7
  $region1: #{tpu_custom_call.1} parent=0
    #allocation4 [shape = 'u8[4096]{0}', space=vmem, size = 0x1000, scoped, tag = 'input window, operand 0, single buffered']
    #allocation5 [shape = 's32[1]{0}', space=sflag, size = 0x4, scoped, tag = 'scoped memory for tpu_custom_call.1']
    #allocation6 [shape = 's32[1]{0}', space=sflag, size = 0x4, scoped, tag = 'scoped memory for tpu_custom_call.1']
    #allocation7 [shape = 'u8[32768]{0}', space=vmem, size = 0x8000, scoped, tag = 'input window, operand 1, single buffered']
    #allocation8 [shape = 's32[1]{0}', space=sflag, size = 0x4, scoped, tag = 'scoped memory for tpu_custom_call.1']
    #allocation9 [shape = 'u8[32768]{0}', space=vmem, size = 0x8000, scoped, tag = 'input window, operand 2, single buffered']
    #allocation10 [shape = 'u8[4096]{0}', space=vmem, size = 0x1000, scoped, tag = 'output window, operand 0, single buffered']
    %11 = vsyncpa [#allocation5], 0
    %12 = vsyncpa [#allocation8], 0
    %13 = vsyncpa [#allocation6], 0
    // Predicated region
    $region2: #{tpu_custom_call.1} parent=1 // pred_check
      _
    $region3: #{tpu_custom_call.1} parent=1 // pred_check_branch
      %15 = sbr.rel (0) target = $region5
    $region4: #{tpu_custom_call.1} parent=1 // pred_region
      %17 = vsyncadd [#allocation5], 0
      %s19 = sshll.u32 %s0, 4
      %s20 = int_to_ptr.hbm [resolvable:$true] %s19
      %s21 = sshll.u32 [#allocation4], 4
      %s22 = int_to_ptr.vmem [resolvable:$true] %s21
      %24 = dma.hbm_to_vmem [thread:$0]  %s20, 128, %s22, [#allocation5]
    $region5: #{tpu_custom_call.1} parent=1 // pred_fallthru
      _
    // Predicated region
    $region6: #{tpu_custom_call.1} parent=1 // pred_check
      _
    $region7: #{tpu_custom_call.1} parent=1 // pred_check_branch
      %26 = sbr.rel (0) target = $region9
    $region8: #{tpu_custom_call.1} parent=1 // pred_region
      %28 = vsyncadd [#allocation8], 0
      %s29 = sshll.u32 %s1, 4
      %s30 = int_to_ptr.hbm [resolvable:$true] %s29
      %s31 = sshll.u32 [#allocation7], 4
      %s32 = int_to_ptr.vmem [resolvable:$true] %s31
      %37 = dma.hbm_to_vmem [thread:$0]  %s30, 1024, %s32, [#allocation8], 64, 64, 4
    $region9: #{tpu_custom_call.1} parent=1 // pred_fallthru
      _
    // Predicated region
    $region10: #{tpu_custom_call.1} parent=1 // pred_check
      _
    $region11: #{tpu_custom_call.1} parent=1 // pred_check_branch
      %39 = sbr.rel (0) target = $region13
    $region12: #{tpu_custom_call.1} parent=1 // pred_region
      %41 = vsyncadd [#allocation8], 0
      %s42 = sshll.u32 %s2, 4
      %s43 = int_to_ptr.hbm [resolvable:$true] %s42
      %s44 = sshll.u32 [#allocation9], 4
      %s45 = int_to_ptr.vmem [resolvable:$true] %s44
      %50 = dma.hbm_to_vmem [thread:$0]  %s43, 1024, %s45, [#allocation8], 64, 64, 4
    $region13: #{tpu_custom_call.1} parent=1 // pred_fallthru
      _
    // Predicated region
    $region14: #{tpu_custom_call.1} parent=1 // pred_check
      _
    $region15: #{tpu_custom_call.1} parent=1 // pred_check_branch
      %52 = sbr.rel (0) target = $region17
    $region16: #{tpu_custom_call.1} parent=1 // pred_region
      _
    $region17: #{tpu_custom_call.1} parent=1 // pred_fallthru
      _
    // Predicated region
    $region18: #{tpu_custom_call.1} parent=1 // pred_check
      _
    $region19: #{tpu_custom_call.1} parent=1 // pred_check_branch
      %54 = sbr.rel (0) target = $region21
    $region20: #{tpu_custom_call.1} parent=1 // pred_region
      _
    $region21: #{tpu_custom_call.1} parent=1 // pred_fallthru
      _
    // Predicated region
    $region22: #{tpu_custom_call.1} parent=1 // pred_check
      _
    $region23: #{tpu_custom_call.1} parent=1 // pred_check_branch
      %56 = sbr.rel (0) target = $region25
    $region24: #{tpu_custom_call.1} parent=1 // pred_region
      _
    $region25: #{tpu_custom_call.1} parent=1 // pred_fallthru
      _
    // Predicated region
    $region26: #{tpu_custom_call.1} parent=1 // pred_check
      _
    $region27: #{tpu_custom_call.1} parent=1 // pred_check_branch
      %58 = sbr.rel (0) target = $region29
    $region28: #{tpu_custom_call.1} parent=1 // pred_region
      %60 = dma.done [#allocation5], 128
    $region29: #{tpu_custom_call.1} parent=1 // pred_fallthru
      _
    // Predicated region
    $region30: #{tpu_custom_call.1} parent=1 // pred_check
      _
    $region31: #{tpu_custom_call.1} parent=1 // pred_check_branch
      %62 = sbr.rel (0) target = $region33
    $region32: #{tpu_custom_call.1} parent=1 // pred_region
      %64 = dma.done [#allocation8], 1024
    $region33: #{tpu_custom_call.1} parent=1 // pred_fallthru
      _
    // Predicated region
    $region34: #{tpu_custom_call.1} parent=1 // pred_check
      _
    $region35: #{tpu_custom_call.1} parent=1 // pred_check_branch
      %66 = sbr.rel (0) target = $region37
    $region36: #{tpu_custom_call.1} parent=1 // pred_region
      %68 = dma.done [#allocation8], 1024
    $region37: #{tpu_custom_call.1} parent=1 // pred_fallthru
      _
    %p69 = scmp.eq.s32.totalorder 0, 0
    // Predicated region
    $region38: #{tpu_custom_call.1} parent=1 // pred_check
      %p70 = pneg %p69
    $region39: #{tpu_custom_call.1} parent=1 // pred_check_branch
      %72 = sbr.rel (%p70) target = $region41
    $region40: #{tpu_custom_call.1} parent=1 // pred_region
      %73 = vst [vmem:[#allocation2] sm:$0xff] 0.0
      %74 = vst [vmem:[#allocation3] sm:$0xff] 0.0
    $region41: #{tpu_custom_call.1} parent=1 // pred_fallthru
      _
    %v75 = vld [vmem:[#allocation4] sm:$0xff]
    %v76 = vld [vmem:[%s3] sm:$0x1]
    %v78 = vperm.slane %v76, 0
    %v80 = vmul.f32 %v75, %v78
    %v81 = vld [vmem:[#allocation7] sm:$0xf]
    %v82 = vld [vmem:[#allocation7 + $0x4] sm:$0xf]
    %v83 = vld [vmem:[#allocation7 + $0x8] sm:$0xf]
    %v84 = vld [vmem:[#allocation7 + $0xc] sm:$0xf]
    %v85 = vld [vmem:[#allocation7 + $0x10] sm:$0xf]
    %v86 = vld [vmem:[#allocation7 + $0x14] sm:$0xf]
    %v87 = vld [vmem:[#allocation7 + $0x18] sm:$0xf]
    %v88 = vld [vmem:[#allocation7 + $0x1c] sm:$0xf]
    %v89 = vld [vmem:[#allocation7 + $0x20] sm:$0xf]
    %v90 = vld [vmem:[#allocation7 + $0x24] sm:$0xf]
    %v91 = vld [vmem:[#allocation7 + $0x28] sm:$0xf]
    %v92 = vld [vmem:[#allocation7 + $0x2c] sm:$0xf]
    %v93 = vld [vmem:[#allocation7 + $0x30] sm:$0xf]
    %v94 = vld [vmem:[#allocation7 + $0x34] sm:$0xf]
    %v95 = vld [vmem:[#allocation7 + $0x38] sm:$0xf]
    %v96 = vld [vmem:[#allocation7 + $0x3c] sm:$0xf]
    %v97 = vld [vmem:[#allocation9] sm:$0xf]
    %v98 = vld [vmem:[#allocation9 + $0x4] sm:$0xf]
    %v99 = vld [vmem:[#allocation9 + $0x8] sm:$0xf]
    %v100 = vld [vmem:[#allocation9 + $0xc] sm:$0xf]
    %v101 = vld [vmem:[#allocation9 + $0x10] sm:$0xf]
    %v102 = vld [vmem:[#allocation9 + $0x14] sm:$0xf]
    %v103 = vld [vmem:[#allocation9 + $0x18] sm:$0xf]
    %v104 = vld [vmem:[#allocation9 + $0x1c] sm:$0xf]
    %v105 = vld [vmem:[#allocation9 + $0x20] sm:$0xf]
    %v106 = vld [vmem:[#allocation9 + $0x24] sm:$0xf]
    %v107 = vld [vmem:[#allocation9 + $0x28] sm:$0xf]
    %v108 = vld [vmem:[#allocation9 + $0x2c] sm:$0xf]
    %v109 = vld [vmem:[#allocation9 + $0x30] sm:$0xf]
    %v110 = vld [vmem:[#allocation9 + $0x34] sm:$0xf]
    %v111 = vld [vmem:[#allocation9 + $0x38] sm:$0xf]
    %v112 = vld [vmem:[#allocation9 + $0x3c] sm:$0xf]
    %v113 = vpack.c.bf16 %v75, %v75
    %v114 = vpack.c.bf16 %v80, %v80
    %v115 = vld [vmem:[#allocation2] sm:$0xff]
    %v132 = vunpack.c.l.b16 %v81
    %v133 = vunpack.c.l.b16 %v82
    %v134 = vunpack.c.l.b16 %v83
    %v135 = vunpack.c.l.b16 %v84
    %v136 = vunpack.c.l.b16 %v85
    %v137 = vunpack.c.l.b16 %v86
    %v138 = vunpack.c.l.b16 %v87
    %v139 = vunpack.c.l.b16 %v88
    %v140 = vunpack.c.l.b16 %v89
    %v141 = vunpack.c.l.b16 %v90
    %v142 = vunpack.c.l.b16 %v91
    %v143 = vunpack.c.l.b16 %v92
    %v144 = vunpack.c.l.b16 %v93
    %v145 = vunpack.c.l.b16 %v94
    %v146 = vunpack.c.l.b16 %v95
    %v147 = vunpack.c.l.b16 %v96
    %v148 = vpack.c.b16 %v133, %v132
    %v149 = vpack.c.b16 %v135, %v134
    %v150 = vpack.c.b16 %v137, %v136
    %v151 = vpack.c.b16 %v139, %v138
    %v152 = vpack.c.b16 %v141, %v140
    %v153 = vpack.c.b16 %v143, %v142
    %v154 = vpack.c.b16 %v145, %v144
    %v155 = vpack.c.b16 %v147, %v146
    %164 = vmatpush.bf16.xpose.msra.mxu0 %v155
    %165 = vmatpush.bf16.xpose.msra.mxu0 %v154
    %166 = vmatpush.bf16.xpose.msra.mxu0 %v153
    %167 = vmatpush.bf16.xpose.msra.mxu0 %v152
    %168 = vmatpush.bf16.xpose.msra.mxu0 %v151
    %169 = vmatpush.bf16.xpose.msra.mxu0 %v150
    %170 = vmatpush.bf16.xpose.msra.mxu0 %v149
    %171 = vmatpush.bf16.xpose.msra.mxu0 %v148
    %172 = vmatmul.bf16.gmra.mxu0 %v113
    %v173 = vpop.f32.mrf.mxu0
    %v174 = vadd.f32 0.0, %v173
    %v175 = vpop.f32.mrf.mxu0
    %176 = vdwg.mxu0
    %v177 = vadd.f32 %v115, %v174
    %178 = vst [vmem:[#allocation2] sm:$0xff] %v177
    %v179 = vld [vmem:[#allocation3] sm:$0xff]
    %v196 = vunpack.c.l.b16 %v97
    %v197 = vunpack.c.l.b16 %v98
    %v198 = vunpack.c.l.b16 %v99
    %v199 = vunpack.c.l.b16 %v100
    %v200 = vunpack.c.l.b16 %v101
    %v201 = vunpack.c.l.b16 %v102
    %v202 = vunpack.c.l.b16 %v103
    %v203 = vunpack.c.l.b16 %v104
    %v204 = vunpack.c.l.b16 %v105
    %v205 = vunpack.c.l.b16 %v106
    %v206 = vunpack.c.l.b16 %v107
    %v207 = vunpack.c.l.b16 %v108
    %v208 = vunpack.c.l.b16 %v109
    %v209 = vunpack.c.l.b16 %v110
    %v210 = vunpack.c.l.b16 %v111
    %v211 = vunpack.c.l.b16 %v112
    %v212 = vpack.c.b16 %v197, %v196
    %v213 = vpack.c.b16 %v199, %v198
    %v214 = vpack.c.b16 %v201, %v200
    %v215 = vpack.c.b16 %v203, %v202
    %v216 = vpack.c.b16 %v205, %v204
    %v217 = vpack.c.b16 %v207, %v206
    %v218 = vpack.c.b16 %v209, %v208
    %v219 = vpack.c.b16 %v211, %v210
    %228 = vmatpush.bf16.xpose.msra.mxu0 %v219
    %229 = vmatpush.bf16.xpose.msra.mxu0 %v218
    %230 = vmatpush.bf16.xpose.msra.mxu0 %v217
    %231 = vmatpush.bf16.xpose.msra.mxu0 %v216
    %232 = vmatpush.bf16.xpose.msra.mxu0 %v215
    %233 = vmatpush.bf16.xpose.msra.mxu0 %v214
    %234 = vmatpush.bf16.xpose.msra.mxu0 %v213
    %235 = vmatpush.bf16.xpose.msra.mxu0 %v212
    %236 = vmatmul.bf16.gmra.mxu0 %v114
    %v237 = vpop.f32.mrf.mxu0
    %v238 = vadd.f32 0.0, %v237
    %v239 = vpop.f32.mrf.mxu0
    %240 = vdwg.mxu0
    %v241 = vadd.f32 %v179, %v238
    %242 = vst [vmem:[#allocation3] sm:$0xff] %v241
    // Predicated region
    $region42: #{tpu_custom_call.1} parent=1 // pred_check
      %p243 = pneg %p69
    $region43: #{tpu_custom_call.1} parent=1 // pred_check_branch
      %245 = sbr.rel (%p243) target = $region45
    $region44: #{tpu_custom_call.1} parent=1 // pred_region
      %v246 = vld [vmem:[#allocation2] sm:$0xff]
      %v247 = vld [vmem:[%s4] sm:$0x1]
      %v248 = vld [vmem:[#allocation3] sm:$0xff]
      %v250 = vperm.slane %v247, 0
      %v252 = vmul.f32 %v250, %v248
      %v253 = vadd.f32 %v246, %v252
      %v254 = vld [vmem:[%s5] sm:$0x1]
      %v256 = vperm.slane %v254, 0
      %v258 = vadd.f32 %v253, %v256
      %259 = vst [vmem:[#allocation10] sm:$0xff] %v258
    $region45: #{tpu_custom_call.1} parent=1 // pred_fallthru
      _
    // Predicated region
    $region46: #{tpu_custom_call.1} parent=1 // pred_check
      _
    $region47: #{tpu_custom_call.1} parent=1 // pred_check_branch
      %261 = sbr.rel (0) target = $region49
    $region48: #{tpu_custom_call.1} parent=1 // pred_region
      %263 = vsyncadd [#allocation6], 0
      %s265 = sshll.u32 [#allocation10], 4
      %s266 = int_to_ptr.vmem [resolvable:$true] %s265
      %s267 = sshll.u32 %s6, 4
      %s268 = int_to_ptr.hbm [resolvable:$true] %s267
      %270 = dma.vmem_to_hbm [thread:$0]  %s266, 128, %s268, [#allocation6]
    $region49: #{tpu_custom_call.1} parent=1 // pred_fallthru
      _
    // Predicated region
    $region50: #{tpu_custom_call.1} parent=1 // pred_check
      _
    $region51: #{tpu_custom_call.1} parent=1 // pred_check_branch
      %272 = sbr.rel (0) target = $region53
    $region52: #{tpu_custom_call.1} parent=1 // pred_region
      %274 = dma.done [#allocation6], 128
    $region53: #{tpu_custom_call.1} parent=1 // pred_fallthru
      _
    %275 = vsyncpa [#allocation5], 1
    %276 = vsyncpa [#allocation8], 1
    %277 = vsyncpa [#allocation6], 1

</llo_original>
